<compile_context>
chip_gen: v6e
topology: v6e:2x2x1
jax: 0.10.0
libtpu: 0.0.40
codegen_flags: <defaults>
</compile_context>

<pallas_src>
import jax
import jax.numpy as jnp
from jax import lax
from jax.experimental import pallas as pl
from jax.experimental.pallas import tpu as pltpu


def _round_up(x, m):
    return ((x + m - 1) // m) * m


# ---------------------------------------------------------------------------
# ModelWithTemperature.temperature_scale / forward:  logits / temperature
# (lane-dense flattened view, big blocks; kept as a standalone kernel since
#  ModelWithTemperature.forward returns the scaled logits themselves.)
# ---------------------------------------------------------------------------
def temperature_scale(logits, temperature, row_block=1024, lanes=512):
    orig_shape = logits.shape
    orig_dtype = logits.dtype

    x = logits.astype(jnp.float32).reshape(-1)
    total = x.shape[0]

    rows_needed = _round_up(pl.cdiv(total, lanes), 8)
    row_block = max(8, min((row_block // 8) * 8, rows_needed))
    rows = _round_up(rows_needed, row_block)
    padded = rows * lanes
    if padded > total:
        x = jnp.pad(x, (0, padded - total))
    x2 = x.reshape(rows, lanes)

    t = jnp.asarray(temperature, jnp.float32).reshape(1, 1)
    grid = (rows // row_block,)

    def kernel(t_ref, x_ref, o_ref):
        # true division (not x * (1/t)): bit-identical to PyTorch's logits / temperature
        o_ref[...] = x_ref[...] / t_ref[0, 0]

    out = pl.pallas_call(
        kernel,
        out_shape=jax.ShapeDtypeStruct((rows, lanes), jnp.float32),
        grid=grid,
        in_specs=[
            pl.BlockSpec(memory_space=pltpu.MemorySpace.SMEM),       # temperature scalar
            pl.BlockSpec((row_block, lanes), lambda i: (i, 0)),
        ],
        out_specs=pl.BlockSpec((row_block, lanes), lambda i: (i, 0)),
        compiler_params=pltpu.CompilerParams(dimension_semantics=("parallel",)),
    )(t, x2)

    return out.reshape(-1)[:total].reshape(orig_shape).astype(orig_dtype)


# ---------------------------------------------------------------------------
# _ECELoss.forward (mode='softmax'), with temperature scaling fused in.
# Returns (result, ECE, ECE2, ECE_binned, ECE2_binned).
# ---------------------------------------------------------------------------
def ece_loss(logits, labels, weights=None, temperature=1.0, n_bins=20,
             return_mode='ECE2', tile=2048):
    N, C = logits.shape
    if weights is None:
        weights = jnp.ones((N,), jnp.float32)

    logits_f = logits.astype(jnp.float32)                            # (N, C), read as-is
    labels_r = labels.astype(jnp.float32).reshape(1, N)              # (1, N) lane-dense
    weights_r = weights.astype(jnp.float32).reshape(1, N)            # (1, N) lane-dense
    t = jnp.asarray(temperature, jnp.float32).reshape(1, 1)

    if N <= tile:
        tile = N
    else:
        tile = max(128, (tile // 128) * 128)
    num_tiles = pl.cdiv(N, tile)
    nbp = _round_up(n_bins, 8)                  # padded bin count for the accumulator

    def kernel(t_ref, logits_ref, labels_ref, w_ref,
               ece_ref, ece2_ref, eceb_ref, ece2b_ref,
               acc_ref, wsum_ref, lhs_ref):
        pid = pl.program_id(0)

        @pl.when(pid == 0)
        def _init():
            acc_ref[...] = jnp.zeros_like(acc_ref)
            wsum_ref[...] = jnp.zeros_like(wsum_ref)
            lhs_ref[...] = jnp.zeros_like(lhs_ref)   # rows 5..7 stay zero forever

        # validity mask for the (possibly partial / overhanging) last tile
        lane = lax.broadcasted_iota(jnp.int32, (1, tile), 1)
        valid = (pid * tile + lane) < N                              # (1, tile) bool

        # (tile, C) -> (C, tile): one in-kernel transpose replaces the wrapper-side
        # XLA transpose (saves a full HBM round trip of the logits); everything after
        # this is lane-dense over samples.
        lg = jnp.transpose(logits_ref[...])                          # (C, tile)
        lg = lg / t_ref[0, 0]                                        # fused temperature scale

        # softmax over classes (sublane axis, depth C); target class = 0
        m = jnp.max(lg, axis=0, keepdims=True)
        e = jnp.exp(lg - m)
        denom = jnp.sum(e, axis=0, keepdims=True)
        conf = jnp.where(valid, e[0:1, :] / denom, 0.0)              # (1, tile)

        lab = jnp.where(valid, labels_ref[...], 0.0)                 # (1, tile)
        w = jnp.where(valid, w_ref[...], 0.0)                        # (1, tile)

        # labels_hat = round(conf); for conf in [0, 1] this is exactly (conf > 0.5)
        acc = ((conf > 0.5).astype(jnp.int32) ==
               lab.astype(jnp.int32)).astype(jnp.float32)            # (1, tile)

        # bin index with a single compare; (lo, hi] boundary semantics.
        # NOTE: padded lanes have conf == 0 -> bin_idx = -1 -> zero membership; do not
        # refactor away the conf > 0 guard or the w/valid masking above.
        nbf = float(n_bins)
        bi = jnp.clip(jnp.ceil(conf * nbf) - 1.0, 0.0, nbf - 1.0).astype(jnp.int32)
        bin_idx = jnp.where(conf > 0.0, bi, -1)                      # (1, tile)

        member = (lax.broadcasted_iota(jnp.int32, (nbp, tile), 0)
                  == bin_idx).astype(jnp.float32)                    # (nbp, tile)

        # per-sample statistic rows into the persistent (8, tile) scratch (rows 5..7 zero)
        lhs_ref[0:1, :] = valid.astype(jnp.float32)   # per-bin count
        lhs_ref[1:2, :] = w                           # per-bin weight sum
        lhs_ref[2:3, :] = w * acc                     # per-bin weighted accuracy sum
        lhs_ref[3:4, :] = w * lab                     # per-bin weighted label (freq) sum
        lhs_ref[4:5, :] = w * conf                    # per-bin weighted confidence sum

        # single MXU matmul does all five bin reductions; contraction runs over the lane
        # axis of BOTH operands, so member.T is never materialized.
        acc_ref[...] += lax.dot_general(
            lhs_ref[...], member,
            dimension_numbers=(((1,), (1,)), ((), ())),
            preferred_element_type=jnp.float32)                      # (8, nbp)
        wsum_ref[...] += jnp.sum(w, axis=1, keepdims=True)           # (1, 1)

        @pl.when(pid == pl.num_programs(0) - 1)
        def _finalize():
            count = acc_ref[0:1, 0:n_bins]
            w_sum = acc_ref[1:2, 0:n_bins]
            acc_s = acc_ref[2:3, 0:n_bins]
            frq_s = acc_ref[3:4, 0:n_bins]
            cnf_s = acc_ref[4:5, 0:n_bins]
            weight_sum = wsum_ref[...]                               # (1, 1)

            has = count > 0.0
            inv = 1.0 / jnp.where(has, w_sum, 1.0)
            acc_b = acc_s * inv
            frq_b = frq_s * inv
            cnf_b = cnf_s * inv
            scale = w_sum / weight_sum

            e1 = scale * (cnf_b - acc_b)
            e2 = scale * (cnf_b - frq_b)

            eceb_ref[...] = jnp.where(has, e1, -999.0)
            ece2b_ref[...] = jnp.where(has, e2, -999.0)
            ece_ref[...] = jnp.sum(jnp.where(has, jnp.abs(e1), 0.0),
                                   axis=1, keepdims=True)
            ece2_ref[...] = jnp.sum(jnp.where(has, jnp.abs(e2), 0.0),
                                    axis=1, keepdims=True)

    out_shape = (
        jax.ShapeDtypeStruct((1, 1), jnp.float32),        # ECE
        jax.ShapeDtypeStruct((1, 1), jnp.float32),        # ECE2
        jax.ShapeDtypeStruct((1, n_bins), jnp.float32),   # ECE_binned
        jax.ShapeDtypeStruct((1, n_bins), jnp.float32),   # ECE2_binned
    )

    grid_spec = pltpu.PrefetchScalarGridSpec(
        num_scalar_prefetch=0,
        grid=(num_tiles,),
        in_specs=[
            pl.BlockSpec(memory_space=pltpu.MemorySpace.SMEM),        # temperature scalar
            pl.BlockSpec((tile, C), lambda i: (i, 0)),                # logits (N, C)
            pl.BlockSpec((1, tile), lambda i: (0, i)),                # labels (1, N)
            pl.BlockSpec((1, tile), lambda i: (0, i)),                # weights (1, N)
        ],
        out_specs=(
            pl.BlockSpec((1, 1), lambda i: (0, 0)),
            pl.BlockSpec((1, 1), lambda i: (0, 0)),
            pl.BlockSpec((1, n_bins), lambda i: (0, 0)),
            pl.BlockSpec((1, n_bins), lambda i: (0, 0)),
        ),
        scratch_shapes=[
            pltpu.VMEM((8, nbp), jnp.float32),    # running per-bin sums
            pltpu.VMEM((1, 1), jnp.float32),      # running total weight sum
            pltpu.VMEM((8, tile), jnp.float32),   # per-tile stacked statistics (lhs)
        ],
    )

    ece, ece2, eceb, ece2b = pl.pallas_call(
        kernel,
        out_shape=out_shape,
        grid_spec=grid_spec,
        compiler_params=pltpu.CompilerParams(
            dimension_semantics=("arbitrary",)),
    )(t, logits_f, labels_r, weights_r)

    result = ece.reshape(1) if return_mode == 'ECE' else ece2.reshape(1)
    return (result, ece.reshape(1), ece2.reshape(1),
            eceb.reshape(n_bins), ece2b.reshape(n_bins))


# ---------------------------------------------------------------------------
# Pure-JAX reference (mirrors the PyTorch loop) for a sanity check.
# ---------------------------------------------------------------------------
def _ece_ref_jax(logits, labels, weights, n_bins=20):
    conf = jax.nn.softmax(logits.astype(jnp.float32), axis=-1)[:, 0]
    acc = (jnp.round(conf).astype(jnp.int32) ==
           labels.astype(jnp.int32)).astype(jnp.float32)
    w = weights.astype(jnp.float32)
    W = jnp.sum(w)
    bounds = jnp.linspace(0.0, 1.0, n_bins + 1)
    ece = 0.0
    ece2 = 0.0
    eceb, ece2b = [], []
    for k in range(n_bins):
        in_bin = jnp.logical_and(conf > bounds[k], conf <= bounds[k + 1]).astype(jnp.float32)
        cnt = jnp.sum(in_bin)
        ws = jnp.sum(w * in_bin)
        safe = jnp.where(cnt > 0, ws, 1.0)
        a = jnp.sum(w * acc * in_bin) / safe
        f = jnp.sum(w * labels.astype(jnp.float32) * in_bin) / safe
        c = jnp.sum(w * conf * in_bin) / safe
        e1 = ws / W * (c - a)
        e2 = ws / W * (c - f)
        ece = ece + jnp.where(cnt > 0, jnp.abs(e1), 0.0)
        ece2 = ece2 + jnp.where(cnt > 0, jnp.abs(e2), 0.0)
        eceb.append(jnp.where(cnt > 0, e1, -999.0))
        ece2b.append(jnp.where(cnt > 0, e2, -999.0))
    return ece, ece2, jnp.stack(eceb), jnp.stack(ece2b)


if __name__ == "__main__":
    key = jax.random.PRNGKey(0)
    k1, k2, k3 = jax.random.split(key, 3)

    N, C, n_bins = 296, 8, 20          # N multiple of 8, NOT of 128 -> exercises tail masking
    logits = jax.random.normal(k1, (N, C), dtype=jnp.float32)
    labels = jax.random.bernoulli(k2, 0.5, (N,)).astype(jnp.float32)
    weights = jax.random.uniform(k3, (N,), jnp.float32, 0.5, 1.5)
    temperature = jnp.float32(1.3)

    # ModelWithTemperature.forward: temperature-scaled logits (standalone kernel)
    scaled = temperature_scale(logits, temperature)
    jax.block_until_ready(scaled)
    assert jnp.allclose(scaled, logits / temperature, rtol=1e-6, atol=1e-6)

    # _ECELoss on temperature-scaled logits — scaling fused into the ECE kernel.
    # tile=128 exercises the multi-tile accumulate + tail-mask path at this small N.
    out, ece, ece2, eceb, ece2b = ece_loss(logits, labels, weights,
                                           temperature=temperature,
                                           n_bins=n_bins, tile=128)
    jax.block_until_ready(out)

    ece_r, ece2_r, eceb_r, ece2b_r = _ece_ref_jax(logits / temperature, labels, weights, n_bins)

    assert jnp.allclose(ece[0], ece_r, atol=2e-5), (ece, ece_r)
    assert jnp.allclose(ece2[0], ece2_r, atol=2e-5), (ece2, ece2_r)
    assert jnp.allclose(eceb, eceb_r, atol=1e-4), (eceb, eceb_r)
    assert jnp.allclose(ece2b, ece2b_r, atol=1e-4), (ece2b, ece2b_r)

    # also run the default big-tile (single-block at this N) path
    out2, *_ = ece_loss(logits, labels, weights, temperature=temperature, n_bins=n_bins)
    jax.block_until_ready(out2)
    assert jnp.allclose(out2, out, atol=2e-5), (out2, out)

    print("KERNEL_OK")
</pallas_src>

<mosaic_0001>
module attributes {stable_mosaic.version = 11 : i64} {
  func.func @kernel(%arg0: i32, %arg1: memref<1x1xf32, #tpu.memory_space<smem>>, %arg2: memref<8x512xf32, #tpu.memory_space<vmem>>, %arg3: memref<8x512xf32, #tpu.memory_space<vmem>>) attributes {dimension_semantics = [#tpu.dimension_semantics<parallel>], iteration_bounds = array<i64: 1>, scalar_prefetch = 0 : i64, scratch_operands = 0 : i64, tpu.core_type = #tpu.core_type<tc>, window_params = [{transform_indices = @transform_0, window_bounds = array<i64: 1, 1>}, {transform_indices = @transform_1, window_bounds = array<i64: 8, 512>}, {transform_indices = @transform_2, window_bounds = array<i64: 8, 512>}]} {
    %c0 = arith.constant 0 : index
    %c0_0 = arith.constant 0 : index
    %0 = vector.load %arg2[%c0, %c0_0] : memref<8x512xf32, #tpu.memory_space<vmem>>, vector<8x512xf32>
    %c0_1 = arith.constant 0 : index
    %c0_2 = arith.constant 0 : index
    %1 = memref.load %arg1[%c0_1, %c0_2] : memref<1x1xf32, #tpu.memory_space<smem>>
    %2 = vector.broadcast %1 : f32 to vector<8x512xf32>
    %3 = arith.divf %0, %2 : vector<8x512xf32>
    %c0_3 = arith.constant 0 : index
    %c0_4 = arith.constant 0 : index
    %4 = vector.load %arg3[%c0_3, %c0_4] : memref<8x512xf32, #tpu.memory_space<vmem>>, vector<8x512xf32>
    tpu.vector_store %arg3[%c0_3, %c0_4], %3 {strides = array<i32>} : memref<8x512xf32, #tpu.memory_space<vmem>>, vector<8x512xf32>,
    return
  }
  func.func @transform_0(%arg0: i32) -> (i32, i32) {
    %c0_i32 = arith.constant 0 : i32
    %c0_i32_0 = arith.constant 0 : i32
    %c0_i32_1 = arith.constant 0 : i32
    return %c0_i32, %c0_i32_0 : i32, i32
  }
  func.func @transform_1(%arg0: i32) -> (i32, i32) {
    %c0_i32 = arith.constant 0 : i32
    %c0_i32_0 = arith.constant 0 : i32
    return %arg0, %c0_i32 : i32, i32
  }
  func.func @transform_2(%arg0: i32) -> (i32, i32) {
    %c0_i32 = arith.constant 0 : i32
    %c0_i32_0 = arith.constant 0 : i32
    return %arg0, %c0_i32 : i32, i32
  }
}

</mosaic_0001>

<llo_original>
// kernel: tpu_custom_call.1
$region0: #{tpu_custom_call.1}
  #allocation0 [shape = 'u32[]', space=smem, size = 0x4, offset = 0x4, fixed_abs, tag = 'smem constant byte address 0x4 - core index']
  #allocation1 [shape = 'u32[144,128]{1,0:T(1,128)}', space=vmem, size = 0x12000, scoped, tag = 'internal scratch']
  #allocation2 [shape = 'f32[1,1]{1,0:T(1,128)S(6)}', space=smem, size = 0x200, scoped, tag = 'scoped memory for tpu_custom_call.1']
  %s0 = inlined_call_operand.<no memory space> [shape: f32[1,1], index: 0, kind: input, shape index: {}]
  %s1 = inlined_call_operand.hbm [shape: f32[8,512], index: 1, kind: input, shape index: {}]
  %s2 = inlined_call_operand.hbm [shape: f32[8,512], index: 2, kind: output, shape index: {}]
  %s3 = sld [smem:[#allocation0]]
  $region22: #{tpu_custom_call.1} parent=0
    _
  %s5 = ssub.s32 1, %s3
  %s6 = scalar_select 0, %s5, %s3
  %7 = sst [smem:[#allocation2]] %s0
  $region1: #{tpu_custom_call.1} parent=0
    #allocation3 [shape = 'u8[16384]{0}', space=vmem, size = 0x4000, scoped, tag = 'input window, operand 1, single buffered']
    #allocation4 [shape = 's32[1]{0}', space=sflag, size = 0x4, scoped, tag = 'scoped memory for tpu_custom_call.1']
    #allocation5 [shape = 's32[1]{0}', space=sflag, size = 0x4, scoped, tag = 'scoped memory for tpu_custom_call.1']
    #allocation6 [shape = 'u8[16384]{0}', space=vmem, size = 0x4000, scoped, tag = 'output window, operand 0, single buffered']
    %8 = vsyncpa [#allocation4], 0
    %9 = vsyncpa [#allocation5], 0
    // Predicated region
    $region2: #{tpu_custom_call.1} parent=1 // pred_check
      _
    $region3: #{tpu_custom_call.1} parent=1 // pred_check_branch
      %11 = sbr.rel (0) target = $region5
    $region4: #{tpu_custom_call.1} parent=1 // pred_region
      _
    $region5: #{tpu_custom_call.1} parent=1 // pred_fallthru
      _
    // Predicated region
    $region6: #{tpu_custom_call.1} parent=1 // pred_check
      _
    $region7: #{tpu_custom_call.1} parent=1 // pred_check_branch
      %13 = sbr.rel (0) target = $region9
    $region8: #{tpu_custom_call.1} parent=1 // pred_region
      %s15 = ssub.s32 512, 512
      %16 = vsyncadd [#allocation4], %s15
      %s18 = sshll.u32 [#allocation3], 4
      %s19 = int_to_ptr.vmem [resolvable:$true] %s18
      %21 = dma.hbm_to_vmem [thread:$0]  %s1, 512, %s19, [#allocation4]
    $region9: #{tpu_custom_call.1} parent=1 // pred_fallthru
      _
    // Predicated region
    $region10: #{tpu_custom_call.1} parent=1 // pred_check
      _
    $region11: #{tpu_custom_call.1} parent=1 // pred_check_branch
      %23 = sbr.rel (0) target = $region13
    $region12: #{tpu_custom_call.1} parent=1 // pred_region
      %24 = dma.done [#allocation4], 512
    $region13: #{tpu_custom_call.1} parent=1 // pred_fallthru
      _
    %v25 = vld [vmem:[#allocation3] sm:$0xff]
    %v26 = vld [vmem:[#allocation3 + $0x8] sm:$0xff]
    %v27 = vld [vmem:[#allocation3 + $0x10] sm:$0xff]
    %v28 = vld [vmem:[#allocation3 + $0x18] sm:$0xff]
    %s29 = sld [smem:[#allocation2]]
    %v30 = vstv %s29
    %v31 = vrcp.pop %v30
    %v32 = vmul.f32 %v25, %v31
    %v33 = vmul.f32 %v26, %v31
    %v34 = vmul.f32 %v27, %v31
    %v35 = vmul.f32 %v28, %v31
    %36 = vst [vmem:[#allocation6] sm:$0xff] %v32
    %37 = vst [vmem:[#allocation6 + $0x8] sm:$0xff] %v33
    %38 = vst [vmem:[#allocation6 + $0x10] sm:$0xff] %v34
    %39 = vst [vmem:[#allocation6 + $0x18] sm:$0xff] %v35
    // Predicated region
    $region14: #{tpu_custom_call.1} parent=1 // pred_check
      _
    $region15: #{tpu_custom_call.1} parent=1 // pred_check_branch
      %41 = sbr.rel (0) target = $region17
    $region16: #{tpu_custom_call.1} parent=1 // pred_region
      %s43 = ssub.s32 512, 512
      %44 = vsyncadd [#allocation5], %s43
      %s46 = sshll.u32 [#allocation6], 4
      %s47 = int_to_ptr.vmem [resolvable:$true] %s46
      %49 = dma.vmem_to_hbm [thread:$0]  %s47, 512, %s2, [#allocation5]
    $region17: #{tpu_custom_call.1} parent=1 // pred_fallthru
      _
    // Predicated region
    $region18: #{tpu_custom_call.1} parent=1 // pred_check
      _
    $region19: #{tpu_custom_call.1} parent=1 // pred_check_branch
      %51 = sbr.rel (0) target = $region21
    $region20: #{tpu_custom_call.1} parent=1 // pred_region
      %52 = dma.done [#allocation5], 512
    $region21: #{tpu_custom_call.1} parent=1 // pred_fallthru
      _
    %53 = vsyncpa [#allocation4], 1
    %54 = vsyncpa [#allocation5], 1

</llo_original>
